<compile_context>
chip_gen: v6e
topology: v6e:2x2x1
jax: 0.10.0
libtpu: 0.0.40
codegen_flags: <defaults>
</compile_context>

<pallas_src>
import functools

import jax
import jax.numpy as jnp
from jax.experimental import pallas as pl
from jax.experimental.pallas import tpu as pltpu

LANE = 128          # vreg lane width
MAX_TB = 512        # max batch rows per grid step


def _round_up(n, m):
    return ((n + m - 1) // m) * m


def _pick_tile(B):
    """Batch rows per grid step.

    Large tiles amortize per-grid-step overhead; keep >= 2 tiles when the
    batch allows so the "parallel" axis can be sharded across v7x's two
    TensorCores (harmless on 1-TC v5e/v6e).  Tile is a multiple of 16 so the
    second-minor dim is layout-friendly for both f32 and bf16 inputs.
    """
    if B >= 2 * MAX_TB:
        return MAX_TB
    half = -(-B // 2)                       # ceil(B / 2)
    return min(MAX_TB, _round_up(max(half, 16), 16))


def actor_kernel(x_ref, w1_ref, b1_ref, w2_ref, b2_ref, w3_ref, b3_ref, o_ref):
    # bf16 MXU operands, f32 accumulation, f32 epilogue.
    x = x_ref[...].astype(jnp.bfloat16)

    # fc1 + ReLU
    h1 = jnp.dot(x, w1_ref[...], preferred_element_type=jnp.float32)
    h1 = jnp.maximum(h1 + b1_ref[...], 0.0)

    # fc2 + ReLU
    h2 = jnp.dot(h1.astype(jnp.bfloat16), w2_ref[...],
                 preferred_element_type=jnp.float32)
    h2 = jnp.maximum(h2 + b2_ref[...], 0.0)

    # fc3 + tanh; store only the real action lanes (narrow output stream).
    h3 = jnp.dot(h2.astype(jnp.bfloat16), w3_ref[...],
                 preferred_element_type=jnp.float32)
    y = jnp.tanh(h3 + b3_ref[...])
    a = o_ref.shape[-1]
    o_ref[...] = y[:, :a].astype(o_ref.dtype)


def prepare_actor_params(w1, b1, w2, b2, w3, b3):
    """One-time prep: lane-pad feature dims and cast weights to bf16.

    Hoisted out of the per-call path so repeated actor_forward calls don't
    re-pad ~0.4 MB of parameters every invocation.  Biases stay f32 (they are
    added in the f32 epilogue).
    """
    S, F1 = w1.shape
    F2 = w2.shape[1]
    A = w3.shape[1]
    F1p = _round_up(F1, LANE)
    F2p = _round_up(F2, LANE)
    Ap = _round_up(A, LANE)

    w1p = jnp.pad(w1, ((0, 0), (0, F1p - F1))).astype(jnp.bfloat16)
    b1p = jnp.pad(b1, ((0, 0), (0, F1p - F1)))
    w2p = jnp.pad(w2, ((0, F1p - F1), (0, F2p - F2))).astype(jnp.bfloat16)
    b2p = jnp.pad(b2, ((0, 0), (0, F2p - F2)))
    w3p = jnp.pad(w3, ((0, F2p - F2), (0, Ap - A))).astype(jnp.bfloat16)
    b3p = jnp.pad(b3, ((0, 0), (0, Ap - A)))
    return (w1p, b1p, w2p, b2p, w3p, b3p)


@functools.partial(jax.jit, static_argnames=("action_size",))
def actor_forward(x, params, *, action_size):
    """x: [B, state_size] f32 (or bf16), params: output of prepare_actor_params."""
    w1, b1, w2, b2, w3, b3 = params
    B, S = x.shape
    F1p = w1.shape[1]
    F2p = w2.shape[1]
    Ap = w3.shape[1]
    A = action_size

    tb = _pick_tile(B)
    Bp = _round_up(B, tb)

    xp = x if Bp == B else jnp.pad(x, ((0, Bp - B), (0, 0)))
    grid = (Bp // tb,)

    out = pl.pallas_call(
        actor_kernel,
        out_shape=jax.ShapeDtypeStruct((Bp, A), jnp.float32),
        grid_spec=pltpu.PrefetchScalarGridSpec(
            num_scalar_prefetch=0,
            grid=grid,
            in_specs=[
                # activations: streamed per batch tile
                pl.BlockSpec((tb, S), lambda i: (i, 0)),
                # weights / biases: constant block index -> VMEM-resident
                pl.BlockSpec((S, F1p), lambda i: (0, 0)),
                pl.BlockSpec((1, F1p), lambda i: (0, 0)),
                pl.BlockSpec((F1p, F2p), lambda i: (0, 0)),
                pl.BlockSpec((1, F2p), lambda i: (0, 0)),
                pl.BlockSpec((F2p, Ap), lambda i: (0, 0)),
                pl.BlockSpec((1, Ap), lambda i: (0, 0)),
            ],
            # narrow output: only the real action columns are written to HBM
            out_specs=pl.BlockSpec((tb, A), lambda i: (i, 0)),
        ),
        compiler_params=pltpu.CompilerParams(
            dimension_semantics=("parallel",),   # shard batch tiles on v7x's 2 TCs
        ),
    )(xp, w1, b1, w2, b2, w3, b3)

    return out if Bp == B else out[:B]


def init_actor_params(key, state_size, action_size, fc1_units=250, fc2_units=175):
    """Deterministic init mirroring Actor.reset_params / nn.Linear defaults.

    hidden_init uses weight.size()[0] == out_features, so fc1/fc2 weights are
    uniform(+-1/sqrt(out_features)); fc3 weights uniform(+-0.003); biases keep
    the nn.Linear default uniform(+-1/sqrt(in_features)).
    Weights are stored as [in, out] (transposed vs. torch's [out, in]).
    """
    ks = jax.random.split(key, 6)

    def u(k, shape, lim):
        return jax.random.uniform(k, shape, jnp.float32, -lim, lim)

    w1 = u(ks[0], (state_size, fc1_units), 1.0 / jnp.sqrt(fc1_units))
    b1 = u(ks[1], (1, fc1_units), 1.0 / jnp.sqrt(state_size))
    w2 = u(ks[2], (fc1_units, fc2_units), 1.0 / jnp.sqrt(fc2_units))
    b2 = u(ks[3], (1, fc2_units), 1.0 / jnp.sqrt(fc1_units))
    w3 = u(ks[4], (fc2_units, action_size), 0.003)
    b3 = u(ks[5], (1, action_size), 1.0 / jnp.sqrt(fc2_units))
    return w1, b1, w2, b2, w3, b3


if __name__ == "__main__":
    key = jax.random.PRNGKey(0)
    k_params, k_state = jax.random.split(key)

    batch = 256          # two batch tiles -> exercises the grid / megacore path
    state_size = 32
    action_size = 4

    raw_params = init_actor_params(k_params, state_size, action_size)
    params = prepare_actor_params(*raw_params)        # one-time pad + bf16 cast
    state = jax.random.normal(k_state, (batch, state_size), jnp.float32)

    out = actor_forward(state, params, action_size=action_size)
    out = jax.block_until_ready(out)

    # Cross-check against a plain-JAX f32 reference of the same forward pass.
    # Tolerance accounts for bf16 MXU operands in the kernel.
    w1, b1, w2, b2, w3, b3 = raw_params
    ref = jnp.tanh(
        jnp.maximum(jnp.maximum(state @ w1 + b1, 0.0) @ w2 + b2, 0.0) @ w3 + b3
    )
    assert out.shape == (batch, action_size)
    max_err = float(jnp.max(jnp.abs(out - ref)))
    assert jnp.allclose(out, ref, atol=1e-2, rtol=1e-2), max_err

    print("KERNEL_OK")
</pallas_src>

<mosaic_0001>
module attributes {stable_mosaic.version = 11 : i64} {
  func.func @actor_kernel(%arg0: i32, %arg1: memref<128x32xf32, #tpu.memory_space<vmem>>, %arg2: memref<32x256xbf16, #tpu.memory_space<vmem>>, %arg3: memref<1x256xf32, #tpu.memory_space<vmem>>, %arg4: memref<256x256xbf16, #tpu.memory_space<vmem>>, %arg5: memref<1x256xf32, #tpu.memory_space<vmem>>, %arg6: memref<256x128xbf16, #tpu.memory_space<vmem>>, %arg7: memref<1x128xf32, #tpu.memory_space<vmem>>, %arg8: memref<128x4xf32, #tpu.memory_space<vmem>>) attributes {dimension_semantics = [#tpu.dimension_semantics<parallel>], iteration_bounds = array<i64: 2>, scalar_prefetch = 0 : i64, scratch_operands = 0 : i64, tpu.core_type = #tpu.core_type<tc>, window_params = [{transform_indices = @transform_0, window_bounds = array<i64: 128, 32>}, {pipeline_mode = #tpu.pipeline_mode<synchronous>, transform_indices = @transform_1, window_bounds = array<i64: 32, 256>}, {pipeline_mode = #tpu.pipeline_mode<synchronous>, transform_indices = @transform_2, window_bounds = array<i64: 1, 256>}, {pipeline_mode = #tpu.pipeline_mode<synchronous>, transform_indices = @transform_3, window_bounds = array<i64: 256, 256>}, {pipeline_mode = #tpu.pipeline_mode<synchronous>, transform_indices = @transform_4, window_bounds = array<i64: 1, 256>}, {pipeline_mode = #tpu.pipeline_mode<synchronous>, transform_indices = @transform_5, window_bounds = array<i64: 256, 128>}, {pipeline_mode = #tpu.pipeline_mode<synchronous>, transform_indices = @transform_6, window_bounds = array<i64: 1, 128>}, {transform_indices = @transform_7, window_bounds = array<i64: 128, 4>}]} {
    %c0 = arith.constant 0 : index
    %c0_0 = arith.constant 0 : index
    %0 = vector.load %arg1[%c0, %c0_0] : memref<128x32xf32, #tpu.memory_space<vmem>>, vector<128x32xf32>
    %1 = arith.truncf %0 : vector<128x32xf32> to vector<128x32xbf16>
    %c0_1 = arith.constant 0 : index
    %c0_2 = arith.constant 0 : index
    %2 = vector.load %arg2[%c0_1, %c0_2] : memref<32x256xbf16, #tpu.memory_space<vmem>>, vector<32x256xbf16>
    %cst = arith.constant dense<0.000000e+00> : vector<128x256xf32>
    %3 = tpu.matmul %1, %2, %cst {dimension_numbers = #tpu.dot_dimension_numbers<[1], [0], [0], [1], [0, 0, 1, 1], [], []>} : vector<128x32xbf16>, vector<32x256xbf16>, vector<128x256xf32> -> vector<128x256xf32>
    %c0_3 = arith.constant 0 : index
    %c0_4 = arith.constant 0 : index
    %4 = vector.load %arg3[%c0_3, %c0_4] : memref<1x256xf32, #tpu.memory_space<vmem>>, vector<1x256xf32>
    %5 = vector.broadcast %4 : vector<1x256xf32> to vector<128x256xf32>
    %6 = arith.addf %3, %5 : vector<128x256xf32>
    %cst_5 = arith.constant 0.000000e+00 : f32
    %7 = vector.broadcast %cst_5 : f32 to vector<128x256xf32>
    %8 = arith.maximumf %6, %7 : vector<128x256xf32>
    %9 = arith.truncf %8 : vector<128x256xf32> to vector<128x256xbf16>
    %c0_6 = arith.constant 0 : index
    %c0_7 = arith.constant 0 : index
    %10 = vector.load %arg4[%c0_6, %c0_7] : memref<256x256xbf16, #tpu.memory_space<vmem>>, vector<256x256xbf16>
    %cst_8 = arith.constant dense<0.000000e+00> : vector<128x256xf32>
    %11 = tpu.matmul %9, %10, %cst_8 {dimension_numbers = #tpu.dot_dimension_numbers<[1], [0], [0], [1], [0, 0, 1, 1], [], []>} : vector<128x256xbf16>, vector<256x256xbf16>, vector<128x256xf32> -> vector<128x256xf32>
    %c0_9 = arith.constant 0 : index
    %c0_10 = arith.constant 0 : index
    %12 = vector.load %arg5[%c0_9, %c0_10] : memref<1x256xf32, #tpu.memory_space<vmem>>, vector<1x256xf32>
    %13 = vector.broadcast %12 : vector<1x256xf32> to vector<128x256xf32>
    %14 = arith.addf %11, %13 : vector<128x256xf32>
    %cst_11 = arith.constant 0.000000e+00 : f32
    %15 = vector.broadcast %cst_11 : f32 to vector<128x256xf32>
    %16 = arith.maximumf %14, %15 : vector<128x256xf32>
    %17 = arith.truncf %16 : vector<128x256xf32> to vector<128x256xbf16>
    %c0_12 = arith.constant 0 : index
    %c0_13 = arith.constant 0 : index
    %18 = vector.load %arg6[%c0_12, %c0_13] : memref<256x128xbf16, #tpu.memory_space<vmem>>, vector<256x128xbf16>
    %cst_14 = arith.constant dense<0.000000e+00> : vector<128x128xf32>
    %19 = tpu.matmul %17, %18, %cst_14 {dimension_numbers = #tpu.dot_dimension_numbers<[1], [0], [0], [1], [0, 0, 1, 1], [], []>} : vector<128x256xbf16>, vector<256x128xbf16>, vector<128x128xf32> -> vector<128x128xf32>
    %c0_15 = arith.constant 0 : index
    %c0_16 = arith.constant 0 : index
    %20 = vector.load %arg7[%c0_15, %c0_16] : memref<1x128xf32, #tpu.memory_space<vmem>>, vector<1x128xf32>
    %21 = vector.broadcast %20 : vector<1x128xf32> to vector<128x128xf32>
    %22 = arith.addf %19, %21 : vector<128x128xf32>
    %23 = math.tanh %22 : vector<128x128xf32>
    %24 = vector.extract_strided_slice %23 {offsets = [0, 0], sizes = [128, 4], strides = [1, 1]} : vector<128x128xf32> to vector<128x4xf32>
    %c0_17 = arith.constant 0 : index
    %c0_18 = arith.constant 0 : index
    %25 = vector.load %arg8[%c0_17, %c0_18] : memref<128x4xf32, #tpu.memory_space<vmem>>, vector<128x4xf32>
    tpu.vector_store %arg8[%c0_17, %c0_18], %24 {strides = array<i32>} : memref<128x4xf32, #tpu.memory_space<vmem>>, vector<128x4xf32>,
    return
  }
  func.func @transform_0(%arg0: i32) -> (i32, i32) {
    %c0_i32 = arith.constant 0 : i32
    %c0_i32_0 = arith.constant 0 : i32
    return %arg0, %c0_i32 : i32, i32
  }
  func.func @transform_1(%arg0: i32) -> (i32, i32) {
    %c0_i32 = arith.constant 0 : i32
    %c0_i32_0 = arith.constant 0 : i32
    %c0_i32_1 = arith.constant 0 : i32
    return %c0_i32, %c0_i32_0 : i32, i32
  }
  func.func @transform_2(%arg0: i32) -> (i32, i32) {
    %c0_i32 = arith.constant 0 : i32
    %c0_i32_0 = arith.constant 0 : i32
    %c0_i32_1 = arith.constant 0 : i32
    return %c0_i32, %c0_i32_0 : i32, i32
  }
  func.func @transform_3(%arg0: i32) -> (i32, i32) {
    %c0_i32 = arith.constant 0 : i32
    %c0_i32_0 = arith.constant 0 : i32
    %c0_i32_1 = arith.constant 0 : i32
    return %c0_i32, %c0_i32_0 : i32, i32
  }
  func.func @transform_4(%arg0: i32) -> (i32, i32) {
    %c0_i32 = arith.constant 0 : i32
    %c0_i32_0 = arith.constant 0 : i32
    %c0_i32_1 = arith.constant 0 : i32
    return %c0_i32, %c0_i32_0 : i32, i32
  }
  func.func @transform_5(%arg0: i32) -> (i32, i32) {
    %c0_i32 = arith.constant 0 : i32
    %c0_i32_0 = arith.constant 0 : i32
    %c0_i32_1 = arith.constant 0 : i32
    return %c0_i32, %c0_i32_0 : i32, i32
  }
  func.func @transform_6(%arg0: i32) -> (i32, i32) {
    %c0_i32 = arith.constant 0 : i32
    %c0_i32_0 = arith.constant 0 : i32
    %c0_i32_1 = arith.constant 0 : i32
    return %c0_i32, %c0_i32_0 : i32, i32
  }
  func.func @transform_7(%arg0: i32) -> (i32, i32) {
    %c0_i32 = arith.constant 0 : i32
    %c0_i32_0 = arith.constant 0 : i32
    return %arg0, %c0_i32 : i32, i32
  }
}

</mosaic_0001>

<llo_original>
// kernel: actor_forward.1
$region0: #{actor_forward.1}
  #allocation0 [shape = 'u32[]', space=smem, size = 0x4, offset = 0x4, fixed_abs, tag = 'smem constant byte address 0x4 - core index']
  #allocation1 [shape = 'u32[144,128]{1,0:T(1,128)}', space=vmem, size = 0x12000, scoped, tag = 'internal scratch']
  %s0 = inlined_call_operand.vmem [shape: f32[256,32], index: 0, kind: input, shape index: {}]
  %s1 = inlined_call_operand.vmem [shape: bf16[32,256], index: 1, kind: input, shape index: {}]
  %s2 = inlined_call_operand.vmem [shape: f32[1,256], index: 2, kind: input, shape index: {}]
  %s3 = inlined_call_operand.vmem [shape: bf16[256,256], index: 3, kind: input, shape index: {}]
  %s4 = inlined_call_operand.vmem [shape: f32[1,256], index: 4, kind: input, shape index: {}]
  %s5 = inlined_call_operand.hbm [shape: bf16[256,128], index: 5, kind: input, shape index: {}]
  %s6 = inlined_call_operand.vmem [shape: f32[1,128], index: 6, kind: input, shape index: {}]
  %s7 = inlined_call_operand.vmem [shape: f32[256,4], index: 7, kind: output, shape index: {}]
  %s8 = sld [smem:[#allocation0]]
  $region65: #{actor_forward.1} parent=0
    _
  %s10 = ssub.s32 1, %s8
  %s11 = scalar_select 0, %s10, %s8
  $region1: #{actor_forward.1} parent=0
    #allocation2 [shape = 'u8[65536]{0}', space=vmem, size = 0x10000, scoped, tag = 'input window, operand 5, single buffered']
    #allocation3 [shape = 's32[2]{0}', space=sflag, size = 0x8, scoped, tag = 'scoped memory for actor_forward.1']
    %12 = vsyncpa [#allocation3], 0
    loop: start=0, step=1, limit=4
    $region2: #{actor_forward.1} parent=1 // loop_pre_header
      _
    $region3: #{actor_forward.1} parent=1 // loop_header
      %s14 = sphi 0, %s18
      %p15 = scmp.ge.s32.totalorder %s14, 4
      %s24 = sphi 0, %s26
      %s27 = sphi 0, %s24
      %s28 = sphi 0, %s27
      %s44 = sphi 0, %s28
      %s48 = sphi 0, %s48
      %s50 = sphi 0, %s48
      %s51 = sphi 0, %s50
      %s65 = sphi 0, %s51
      %s69 = sphi 0, %s69
      %s71 = sphi 0, %s69
      %s72 = sphi 0, %s71
      %s86 = sphi 0, %s72
      %s90 = sphi 0, %s90
      %s92 = sphi 0, %s90
      %s93 = sphi 0, %s92
      %s107 = sphi 0, %s93
      %s111 = sphi 0, %s111
      %s113 = sphi 0, %s111
      %s114 = sphi 0, %s113
      %s128 = sphi 0, %s114
      %s132 = sphi 0, %s132
      %s134 = sphi 0, %s132
      %s135 = sphi 0, %s134
      %s149 = sphi 0, %s135
      %s153 = sphi 0, %s153
      %s155 = sphi 0, %s153
      %s156 = sphi 0, %s155
      %s170 = sphi 0, %s156
      %s176 = sphi 0, %s178
      %s179 = sphi 0, %s176
      %s180 = sphi 0, %s179
      %s196 = sphi 0, %s180
    $region4: #{actor_forward.1} parent=1 // loop_header_branch
      %17 = sbr.rel (%p15) target = $region8
    $region5: #{actor_forward.1} parent=1 // loop_body
      %s19 = ssub.s32 %s14, 1
      %s20 = ssub.s32 %s14, 2
      %s21 = sadd.s32 %s14, 1
      %s22 = ssub.s32 %s14, %s21
      %p23 = scmp.eq.s32.totalorder %s22, 0
      %s25 = sadd.s32 %s24, 1
      %s26 = scalar_select %p23, %s24, %s25
      %p29 = pneg %p23
      %p30 = scmp.eq.s32.totalorder %s14, 1
      %p31 = por %p29, %p30
      %p32 = scmp.ne.s32.totalorder %s24, %s27
      %p33 = scmp.eq.s32.totalorder %s14, 0
      %p34 = por %p32, %p33
      %p35 = scmp.ne.s32.totalorder %s24, %s27
      %p36 = scmp.eq.s32.totalorder %s19, 1
      %p37 = por %p35, %p36
      %p38 = scmp.ne.s32.totalorder %s27, %s28
      %p39 = scmp.eq.s32.totalorder %s19, 0
      %p40 = por %p38, %p39
      %p41 = scmp.ne.s32.totalorder %s27, %s28
      %p42 = scmp.eq.s32.totalorder %s20, 1
      %p43 = por %p41, %p42
      %p45 = scmp.ne.s32.totalorder %s28, %s44
      %p46 = scmp.eq.s32.totalorder %s20, 0
      %p47 = por %p45, %p46
      %s49 = sadd.s32 %s48, 1
      %p52 = scmp.eq.s32.totalorder %s14, 1
      %p53 = scmp.ne.s32.totalorder %s48, %s50
      %p54 = scmp.eq.s32.totalorder %s14, 0
      %p55 = por %p53, %p54
      %p56 = scmp.ne.s32.totalorder %s48, %s50
      %p57 = scmp.eq.s32.totalorder %s19, 1
      %p58 = por %p56, %p57
      %p59 = scmp.ne.s32.totalorder %s50, %s51
      %p60 = scmp.eq.s32.totalorder %s19, 0
      %p61 = por %p59, %p60
      %p62 = scmp.ne.s32.totalorder %s50, %s51
      %p63 = scmp.eq.s32.totalorder %s20, 1
      %p64 = por %p62, %p63
      %p66 = scmp.ne.s32.totalorder %s51, %s65
      %p67 = scmp.eq.s32.totalorder %s20, 0
      %p68 = por %p66, %p67
      %s70 = sadd.s32 %s69, 1
      %p73 = scmp.eq.s32.totalorder %s14, 1
      %p74 = scmp.ne.s32.totalorder %s69, %s71
      %p75 = scmp.eq.s32.totalorder %s14, 0
      %p76 = por %p74, %p75
      %p77 = scmp.ne.s32.totalorder %s69, %s71
      %p78 = scmp.eq.s32.totalorder %s19, 1
      %p79 = por %p77, %p78
      %p80 = scmp.ne.s32.totalorder %s71, %s72
      %p81 = scmp.eq.s32.totalorder %s19, 0
      %p82 = por %p80, %p81
      %p83 = scmp.ne.s32.totalorder %s71, %s72
      %p84 = scmp.eq.s32.totalorder %s20, 1
      %p85 = por %p83, %p84
      %p87 = scmp.ne.s32.totalorder %s72, %s86
      %p88 = scmp.eq.s32.totalorder %s20, 0
      %p89 = por %p87, %p88
      %s91 = sadd.s32 %s90, 1
      %p94 = scmp.eq.s32.totalorder %s14, 1
      %p95 = scmp.ne.s32.totalorder %s90, %s92
      %p96 = scmp.eq.s32.totalorder %s14, 0
      %p97 = por %p95, %p96
      %p98 = scmp.ne.s32.totalorder %s90, %s92
      %p99 = scmp.eq.s32.totalorder %s19, 1
      %p100 = por %p98, %p99
      %p101 = scmp.ne.s32.totalorder %s92, %s93
      %p102 = scmp.eq.s32.totalorder %s19, 0
      %p103 = por %p101, %p102
      %p104 = scmp.ne.s32.totalorder %s92, %s93
      %p105 = scmp.eq.s32.totalorder %s20, 1
      %p106 = por %p104, %p105
      %p108 = scmp.ne.s32.totalorder %s93, %s107
      %p109 = scmp.eq.s32.totalorder %s20, 0
      %p110 = por %p108, %p109
      %s112 = sadd.s32 %s111, 1
      %p115 = scmp.eq.s32.totalorder %s14, 1
      %p116 = scmp.ne.s32.totalorder %s111, %s113
      %p117 = scmp.eq.s32.totalorder %s14, 0
      %p118 = por %p116, %p117
      %p119 = scmp.ne.s32.totalorder %s111, %s113
      %p120 = scmp.eq.s32.totalorder %s19, 1
      %p121 = por %p119, %p120
      %p122 = scmp.ne.s32.totalorder %s113, %s114
      %p123 = scmp.eq.s32.totalorder %s19, 0
      %p124 = por %p122, %p123
      %p125 = scmp.ne.s32.totalorder %s113, %s114
      %p126 = scmp.eq.s32.totalorder %s20, 1
      %p127 = por %p125, %p126
      %p129 = scmp.ne.s32.totalorder %s114, %s128
      %p130 = scmp.eq.s32.totalorder %s20, 0
      %p131 = por %p129, %p130
      %s133 = sadd.s32 %s132, 1
      %p136 = scmp.eq.s32.totalorder %s14, 1
      %p137 = scmp.ne.s32.totalorder %s132, %s134
      %p138 = scmp.eq.s32.totalorder %s14, 0
      %p139 = por %p137, %p138
      %p140 = scmp.ne.s32.totalorder %s132, %s134
      %p141 = scmp.eq.s32.totalorder %s19, 1
      %p142 = por %p140, %p141
      %p143 = scmp.ne.s32.totalorder %s134, %s135
      %p144 = scmp.eq.s32.totalorder %s19, 0
      %p145 = por %p143, %p144
      %p146 = scmp.ne.s32.totalorder %s134, %s135
      %p147 = scmp.eq.s32.totalorder %s20, 1
      %p148 = por %p146, %p147
      %p150 = scmp.ne.s32.totalorder %s135, %s149
      %p151 = scmp.eq.s32.totalorder %s20, 0
      %p152 = por %p150, %p151
      %s154 = sadd.s32 %s153, 1
      %p157 = scmp.eq.s32.totalorder %s14, 1
      %p158 = scmp.ne.s32.totalorder %s153, %s155
      %p159 = scmp.eq.s32.totalorder %s14, 0
      %p160 = por %p158, %p159
      %p161 = scmp.ne.s32.totalorder %s153, %s155
      %p162 = scmp.eq.s32.totalorder %s19, 1
      %p163 = por %p161, %p162
      %p164 = scmp.ne.s32.totalorder %s155, %s156
      %p165 = scmp.eq.s32.totalorder %s19, 0
      %p166 = por %p164, %p165
      %p167 = scmp.ne.s32.totalorder %s155, %s156
      %p168 = scmp.eq.s32.totalorder %s20, 1
      %p169 = por %p167, %p168
      %p171 = scmp.ne.s32.totalorder %s156, %s170
      %p172 = scmp.eq.s32.totalorder %s20, 0
      %p173 = por %p171, %p172
      %s174 = ssub.s32 %s14, %s21
      %p175 = scmp.eq.s32.totalorder %s174, 0
      %s177 = sadd.s32 %s176, 1
      %s178 = scalar_select %p175, %s176, %s177
      %p181 = pneg %p175
      %p182 = scmp.eq.s32.totalorder %s14, 1
      %p183 = por %p181, %p182
      %p184 = scmp.ne.s32.totalorder %s176, %s179
      %p185 = scmp.eq.s32.totalorder %s14, 0
      %p186 = por %p184, %p185
      %p187 = scmp.ne.s32.totalorder %s176, %s179
      %p188 = scmp.eq.s32.totalorder %s19, 1
      %p189 = por %p187, %p188
      %p190 = scmp.ne.s32.totalorder %s179, %s180
      %p191 = scmp.eq.s32.totalorder %s19, 0
      %p192 = por %p190, %p191
      %p193 = scmp.ne.s32.totalorder %s179, %s180
      %p194 = scmp.eq.s32.totalorder %s20, 1
      %p195 = por %p193, %p194
      %p197 = scmp.ne.s32.totalorder %s180, %s196
      %p198 = scmp.eq.s32.totalorder %s20, 0
      %p199 = por %p197, %p198
      %p200 = scmp.le.s32.totalorder 1, %s14
      %p201 = scmp.lt.s32.totalorder %s14, 3
      %p202 = pnand %p200, %p201
      %p203 = pneg %p202
      // Predicated region
      $region9: #{actor_forward.1} parent=5 // pred_check
        _
      $region10: #{actor_forward.1} parent=5 // pred_check_branch
        %205 = sbr.rel (%p202) target = $region12
      $region11: #{actor_forward.1} parent=5 // pred_region
        %s206 = ssub.s32 %s14, 1
        // Predicated region
        $region13: #{actor_forward.1} parent=11 // pred_check
          %p207 = pneg %p61
        $region14: #{actor_forward.1} parent=11 // pred_check_branch
          %209 = sbr.rel (%p207) target = $region16
        $region15: #{actor_forward.1} parent=11 // pred_region
          _
        $region16: #{actor_forward.1} parent=11 // pred_fallthru
          _
        // Predicated region
        $region17: #{actor_forward.1} parent=11 // pred_check
          %p210 = pneg %p82
        $region18: #{actor_forward.1} parent=11 // pred_check_branch
          %212 = sbr.rel (%p210) target = $region20
        $region19: #{actor_forward.1} parent=11 // pred_region
          _
        $region20: #{actor_forward.1} parent=11 // pred_fallthru
          _
        // Predicated region
        $region21: #{actor_forward.1} parent=11 // pred_check
          %p213 = pneg %p103
        $region22: #{actor_forward.1} parent=11 // pred_check_branch
          %215 = sbr.rel (%p213) target = $region24
        $region23: #{actor_forward.1} parent=11 // pred_region
          _
        $region24: #{actor_forward.1} parent=11 // pred_fallthru
          _
        // Predicated region
        $region25: #{actor_forward.1} parent=11 // pred_check
          %p216 = pneg %p124
        $region26: #{actor_forward.1} parent=11 // pred_check_branch
          %218 = sbr.rel (%p216) target = $region28
        $region27: #{actor_forward.1} parent=11 // pred_region
          _
        $region28: #{actor_forward.1} parent=11 // pred_fallthru
          _
        // Predicated region
        $region29: #{actor_forward.1} parent=11 // pred_check
          %p219 = pneg %p145
        $region30: #{actor_forward.1} parent=11 // pred_check_branch
          %221 = sbr.rel (%p219) target = $region32
        $region31: #{actor_forward.1} parent=11 // pred_region
          %s223 = ssub.s32 2048, 2048
          %224 = vsyncadd [#allocation3], %s223
          %s225 = sshll.u32 [#allocation2], 4
          %s226 = int_to_ptr.vmem [resolvable:$true] %s225
          %231 = dma.hbm_to_vmem [thread:$0]  %s5, 2048, %s226, [#allocation3], 64, 64, 4
        $region32: #{actor_forward.1} parent=11 // pred_fallthru
          _
        // Predicated region
        $region33: #{actor_forward.1} parent=11 // pred_check
          %p232 = pneg %p166
        $region34: #{actor_forward.1} parent=11 // pred_check_branch
          %234 = sbr.rel (%p232) target = $region36
        $region35: #{actor_forward.1} parent=11 // pred_region
          _
        $region36: #{actor_forward.1} parent=11 // pred_fallthru
          _
      $region12: #{actor_forward.1} parent=5 // pred_fallthru
        _
      %p235 = scmp.lt.s32.totalorder %s14, 2
      // Predicated region
      $region37: #{actor_forward.1} parent=5 // pred_check
        %p236 = pneg %p235
      $region38: #{actor_forward.1} parent=5 // pred_check_branch
        %238 = sbr.rel (%p236) target = $region40
      $region39: #{actor_forward.1} parent=5 // pred_region
        // Predicated region
        $region41: #{actor_forward.1} parent=39 // pred_check
          %p239 = pneg %p34
        $region42: #{actor_forward.1} parent=39 // pred_check_branch
          %241 = sbr.rel (%p239) target = $region44
        $region43: #{actor_forward.1} parent=39 // pred_region
          %s242 = smul.u32 16, %s14
          %p243 = scmp.lt.s32.totalorder %s242, 31
          %s244 = scalar_select %p243, %s242, 31
          %s245 = smul.addr %s244, 8
          %s246 = scalar_lea.vmem %s0, %s245
          %s247 = smul.u32 16, %s14
        $region44: #{actor_forward.1} parent=39 // pred_fallthru
          _
      $region40: #{actor_forward.1} parent=5 // pred_fallthru
        _
      %p248 = scmp.le.s32.totalorder 1, %s14
      %p249 = scmp.lt.s32.totalorder %s14, 3
      %p250 = pnand %p248, %p249
      %p251 = pneg %p250
      // Predicated region
      $region45: #{actor_forward.1} parent=5 // pred_check
        _
      $region46: #{actor_forward.1} parent=5 // pred_check_branch
        %253 = sbr.rel (%p250) target = $region48
      $region47: #{actor_forward.1} parent=5 // pred_region
        %s254 = ssub.s32 %s14, 1
        // Predicated region
        $region49: #{actor_forward.1} parent=47 // pred_check
          %p255 = pneg %p145
        $region50: #{actor_forward.1} parent=47 // pred_check_branch
          %257 = sbr.rel (%p255) target = $region52
        $region51: #{actor_forward.1} parent=47 // pred_region
          %258 = dma.done [#allocation3], 2048
        $region52: #{actor_forward.1} parent=47 // pred_fallthru
          _
        %s259 = smul.u32 16, %s19
        %p260 = scmp.lt.s32.totalorder %s259, 31
        %s261 = scalar_select %p260, %s259, 31
        %s262 = smul.addr %s261, 8
        %s263 = scalar_lea.vmem %s0, %s262
        %p264 = pneg %p40
        %p265 = pneg %p37
        %p266 = pneg %p61
        %p267 = pneg %p58
        %p268 = pneg %p82
        %p269 = pneg %p79
        %p270 = pneg %p103
        %p271 = pneg %p100
        %p272 = pneg %p124
        %p273 = pneg %p121
        %p274 = pneg %p145
        %p275 = pneg %p142
        %p276 = pneg %p166
        %p277 = pneg %p163
        %p278 = pneg %p192
        %p279 = pneg %p189
        %s280 = smul.u32 16, %s19
        %p281 = scmp.lt.s32.totalorder %s280, 31
        %s282 = scalar_select %p281, %s280, 31
        %s283 = smul.addr %s282, 8
        %s284 = scalar_lea.vmem %s7, %s283
        %s285 = smul.u32 16, %s19
        %p286 = scmp.lt.s32.totalorder %s285, 31
        %s287 = scalar_select %p286, %s285, 31
        %s288 = smul.addr %s287, 8
        %s289 = scalar_lea.vmem %s0, %s288
        %s290 = smul.u32 16, %s19
        %s291 = smul.u32 16, %s19
        %p292 = scmp.lt.s32.totalorder %s291, 31
        %s293 = scalar_select %p292, %s291, 31
        %s294 = smul.addr %s293, 8
        %s295 = scalar_lea.vmem %s7, %s294
        %s296 = smul.u32 16, %s19
        %v298 = vld [vmem:[%s289] sm:$0xff]
        %v299 = vld [vmem:[%s289 + $0x8] sm:$0xff]
        %v300 = vld [vmem:[%s289 + $0x10] sm:$0xff]
        %v301 = vld [vmem:[%s289 + $0x18] sm:$0xff]
        %v302 = vld [vmem:[%s289 + $0x20] sm:$0xff]
        %v303 = vld [vmem:[%s289 + $0x28] sm:$0xff]
        %v304 = vld [vmem:[%s289 + $0x30] sm:$0xff]
        %v305 = vld [vmem:[%s289 + $0x38] sm:$0xff]
        %v306 = vld [vmem:[%s289 + $0x40] sm:$0xff]
        %v307 = vld [vmem:[%s289 + $0x48] sm:$0xff]
        %v308 = vld [vmem:[%s289 + $0x50] sm:$0xff]
        %v309 = vld [vmem:[%s289 + $0x58] sm:$0xff]
        %v310 = vld [vmem:[%s289 + $0x60] sm:$0xff]
        %v311 = vld [vmem:[%s289 + $0x68] sm:$0xff]
        %v312 = vld [vmem:[%s289 + $0x70] sm:$0xff]
        %v313 = vld [vmem:[%s289 + $0x78] sm:$0xff]
        %v314 = vpack.c.bf16 %v299, %v298
        %v315 = vpack.c.bf16 %v301, %v300
        %v316 = vpack.c.bf16 %v303, %v302
        %v317 = vpack.c.bf16 %v305, %v304
        %v318 = vpack.c.bf16 %v307, %v306
        %v319 = vpack.c.bf16 %v309, %v308
        %v320 = vpack.c.bf16 %v311, %v310
        %v321 = vpack.c.bf16 %v313, %v312
        %v322 = vld [vmem:[%s1] sm:$0xff]
        %v323 = vld [vmem:[%s1 + $0x8] sm:$0xff]
        %v324 = vld [vmem:[%s1 + $0x10] sm:$0xff]
        %v325 = vld [vmem:[%s1 + $0x18] sm:$0xff]
        %v326 = vld [vmem:[%s2] sm:$0x3]
        %v328 = vlaneseq
        %v329 = vshrl.u32 %v328, 7
        %v330 = vsub.s32 0, %v329
        %v331 = vrot.slane %v326, %v330
        %v332 = vlaneseq
        %v333 = vshrl.u32 %v332, 7
        %v334 = vsub.s32 1, %v333
        %v335 = vrot.slane %v326, %v334
        %v342 = vunpack.c.l.b16 %v322
        %v343 = vunpack.c.h.b16 %v322
        %v344 = vunpack.c.l.b16 %v323
        %v345 = vunpack.c.h.b16 %v323
        %v346 = vunpack.c.l.b16 %v324
        %v347 = vunpack.c.h.b16 %v324
        %v348 = vunpack.c.l.b16 %v325
        %v349 = vunpack.c.h.b16 %v325
        %v350 = vpack.c.b16 %v344, %v342
        %v351 = vpack.c.b16 %v345, %v343
        %v352 = vpack.c.b16 %v348, %v346
        %v353 = vpack.c.b16 %v349, %v347
        %vm358 = vcmask 261120
        %v360 = vsel %vm358, %v314, 0
        %v363 = vsel %vm358, %v315, 0
        %v366 = vsel %vm358, %v316, 0
        %v369 = vsel %vm358, %v317, 0
        %v372 = vsel %vm358, %v318, 0
        %v375 = vsel %vm358, %v319, 0
        %v378 = vsel %vm358, %v320, 0
        %v381 = vsel %vm358, %v321, 0
        %383 = vmatprep.subr.bf16.mxu0 0
        %384 = vmatpush1.bf16.msra.mxu0 0
        %385 = vmatprep.subr.bf16.mxu0 0
        %386 = vmatpush1.bf16.msra.mxu0 0
        %387 = vmatprep.subr.bf16.mxu0 0
        %388 = vmatpush1.bf16.msra.mxu0 0
        %389 = vmatprep.subr.bf16.mxu0 0
        %390 = vmatpush1.bf16.msra.mxu0 0
        %391 = vmatprep.subr.bf16.mxu0 0
        %392 = vmatpush1.bf16.msra.mxu0 0
        %393 = vmatprep.subr.bf16.mxu0 0
        %394 = vmatpush1.bf16.msra.mxu0 0
        %395 = vmatprep.subr.bf16.mxu0 %v353
        %396 = vmatpush1.bf16.msra.mxu0 %v352
        %397 = vmatprep.subr.bf16.mxu0 %v351
        %398 = vmatpush1.bf16.msra.mxu0 %v350
        %399 = vmatprep.subr.bf16.mxu0 0
        %400 = vmatpush2.bf16.msra.mxu0 0
        %401 = vmatprep.subr.bf16.mxu0 0
        %402 = vmatpush2.bf16.msra.mxu0 0
        %403 = vmatprep.subr.bf16.mxu0 0
        %404 = vmatpush2.bf16.msra.mxu0 0
        %405 = vmatprep.subr.bf16.mxu0 0
        %406 = vmatpush2.bf16.msra.mxu0 0
        %407 = vmatprep.subr.bf16.mxu0 0
        %408 = vmatpush2.bf16.msra.mxu0 0
        %409 = vmatprep.subr.bf16.mxu0 0
        %410 = vmatpush2.bf16.msra.mxu0 0
        %411 = vmatprep.subr.bf16.mxu0 0
        %412 = vmatpush2.bf16.msra.mxu0 0
        %413 = vmatprep.subr.bf16.mxu0 0
        %414 = vmatpush2.bf16.msra.mxu0 0
        %415 = vmatprep.mubr.bf16.mxu0 0
        %416 = vmatmul.mubr.bf16.gmra.mxu0 %v360
        %v417 = vpop.f32.mrf.mxu0
        %v418 = vadd.f32 %v331, %v417
        %v419 = vpop.f32.mrf.mxu0
        %v420 = vadd.f32 %v335, %v419
        %v421 = vpop.f32.mrf.mxu0
        %v422 = vadd.f32 %v331, %v421
        %v423 = vpop.f32.mrf.mxu0
        %v424 = vadd.f32 %v335, %v423
        %425 = vmatprep.mubr.bf16.mxu0 0
        %426 = vmatmul.mubr.bf16.gmra.mxu0 %v363
        %v427 = vpop.f32.mrf.mxu0
        %v428 = vadd.f32 %v331, %v427
        %v429 = vpop.f32.mrf.mxu0
        %v430 = vadd.f32 %v335, %v429
        %v431 = vpop.f32.mrf.mxu0
        %v432 = vadd.f32 %v331, %v431
        %v433 = vpop.f32.mrf.mxu0
        %v434 = vadd.f32 %v335, %v433
        %435 = vmatprep.mubr.bf16.mxu0 0
        %436 = vmatmul.mubr.bf16.gmra.mxu0 %v366
        %v437 = vpop.f32.mrf.mxu0
        %v438 = vadd.f32 %v331, %v437
        %v439 = vpop.f32.mrf.mxu0
        %v440 = vadd.f32 %v335, %v439
        %v441 = vpop.f32.mrf.mxu0
        %v442 = vadd.f32 %v331, %v441
        %v443 = vpop.f32.mrf.mxu0
        %v444 = vadd.f32 %v335, %v443
        %445 = vmatprep.mubr.bf16.mxu0 0
        %446 = vmatmul.mubr.bf16.gmra.mxu0 %v369
        %v447 = vpop.f32.mrf.mxu0
        %v448 = vadd.f32 %v331, %v447
        %v449 = vpop.f32.mrf.mxu0
        %v450 = vadd.f32 %v335, %v449
        %v451 = vpop.f32.mrf.mxu0
        %v452 = vadd.f32 %v331, %v451
        %v453 = vpop.f32.mrf.mxu0
        %v454 = vadd.f32 %v335, %v453
        %455 = vmatprep.mubr.bf16.mxu0 0
        %456 = vmatmul.mubr.bf16.gmra.mxu0 %v372
        %v457 = vpop.f32.mrf.mxu0
        %v458 = vadd.f32 %v331, %v457
        %v459 = vpop.f32.mrf.mxu0
        %v460 = vadd.f32 %v335, %v459
        %v461 = vpop.f32.mrf.mxu0
        %v462 = vadd.f32 %v331, %v461
        %v463 = vpop.f32.mrf.mxu0
        %v464 = vadd.f32 %v335, %v463
        %465 = vmatprep.mubr.bf16.mxu0 0
        %466 = vmatmul.mubr.bf16.gmra.mxu0 %v375
        %v467 = vpop.f32.mrf.mxu0
        %v468 = vadd.f32 %v331, %v467
        %v469 = vpop.f32.mrf.mxu0
        %v470 = vadd.f32 %v335, %v469
        %v471 = vpop.f32.mrf.mxu0
        %v472 = vadd.f32 %v331, %v471
        %v473 = vpop.f32.mrf.mxu0
        %v474 = vadd.f32 %v335, %v473
        %475 = vmatprep.mubr.bf16.mxu0 0
        %476 = vmatmul.mubr.bf16.gmra.mxu0 %v378
        %v477 = vpop.f32.mrf.mxu0
        %v478 = vadd.f32 %v331, %v477
        %v479 = vpop.f32.mrf.mxu0
        %v480 = vadd.f32 %v335, %v479
        %v481 = vpop.f32.mrf.mxu0
        %v482 = vadd.f32 %v331, %v481
        %v483 = vpop.f32.mrf.mxu0
        %v484 = vadd.f32 %v335, %v483
        %485 = vmatprep.mubr.bf16.mxu0 0
        %486 = vmatmul.mubr.bf16.gmra.mxu0 %v381
        %v487 = vpop.f32.mrf.mxu0
        %v488 = vadd.f32 %v331, %v487
        %v489 = vpop.f32.mrf.mxu0
        %v490 = vadd.f32 %v335, %v489
        %v491 = vpop.f32.mrf.mxu0
        %v492 = vadd.f32 %v331, %v491
        %v493 = vpop.f32.mrf.mxu0
        %v494 = vadd.f32 %v335, %v493
        %495 = vdwg.mxu0
        %v496 = vmax.f32 %v418, 0.0
        %v497 = vmax.f32 %v420, 0.0
        %v498 = vmax.f32 %v422, 0.0
        %v499 = vmax.f32 %v424, 0.0
        %v500 = vmax.f32 %v428, 0.0
        %v501 = vmax.f32 %v430, 0.0
        %v502 = vmax.f32 %v432, 0.0
        %v503 = vmax.f32 %v434, 0.0
        %v504 = vmax.f32 %v438, 0.0
        %v505 = vmax.f32 %v440, 0.0
        %v506 = vmax.f32 %v442, 0.0
        %v507 = vmax.f32 %v444, 0.0
        %v508 = vmax.f32 %v448, 0.0
        %v509 = vmax.f32 %v450, 0.0
        %v510 = vmax.f32 %v452, 0.0
        %v511 = vmax.f32 %v454, 0.0
        %v512 = vmax.f32 %v458, 0.0
        %v513 = vmax.f32 %v460, 0.0
        %v514 = vmax.f32 %v462, 0.0
        %v515 = vmax.f32 %v464, 0.0
        %v516 = vmax.f32 %v468, 0.0
        %v517 = vmax.f32 %v470, 0.0
        %v518 = vmax.f32 %v472, 0.0
        %v519 = vmax.f32 %v474, 0.0
        %v520 = vmax.f32 %v478, 0.0
        %v521 = vmax.f32 %v480, 0.0
        %v522 = vmax.f32 %v482, 0.0
        %v523 = vmax.f32 %v484, 0.0
        %v524 = vmax.f32 %v488, 0.0
        %v525 = vmax.f32 %v490, 0.0
        %v526 = vmax.f32 %v492, 0.0
        %v527 = vmax.f32 %v494, 0.0
        %v528 = vpack.c.bf16 %v498, %v496
        %v529 = vpack.c.bf16 %v499, %v497
        %v530 = vpack.c.bf16 %v502, %v500
        %v531 = vpack.c.bf16 %v503, %v501
        %v532 = vpack.c.bf16 %v506, %v504
        %v533 = vpack.c.bf16 %v507, %v505
        %v534 = vpack.c.bf16 %v510, %v508
        %v535 = vpack.c.bf16 %v511, %v509
        %v536 = vpack.c.bf16 %v514, %v512
        %v537 = vpack.c.bf16 %v515, %v513
        %v538 = vpack.c.bf16 %v518, %v516
        %v539 = vpack.c.bf16 %v519, %v517
        %v540 = vpack.c.bf16 %v522, %v520
        %v541 = vpack.c.bf16 %v523, %v521
        %v542 = vpack.c.bf16 %v526, %v524
        %v543 = vpack.c.bf16 %v527, %v525
        %v544 = vld [vmem:[%s3] sm:$0xff]
        %v545 = vld [vmem:[%s3 + $0x8] sm:$0xff]
        %v546 = vld [vmem:[%s3 + $0x10] sm:$0xff]
        %v547 = vld [vmem:[%s3 + $0x18] sm:$0xff]
        %v548 = vld [vmem:[%s3 + $0x20] sm:$0xff]
        %v549 = vld [vmem:[%s3 + $0x28] sm:$0xff]
        %v550 = vld [vmem:[%s3 + $0x30] sm:$0xff]
        %v551 = vld [vmem:[%s3 + $0x38] sm:$0xff]
        %v552 = vld [vmem:[%s3 + $0x40] sm:$0xff]
        %v553 = vld [vmem:[%s3 + $0x48] sm:$0xff]
        %v554 = vld [vmem:[%s3 + $0x50] sm:$0xff]
        %v555 = vld [vmem:[%s3 + $0x58] sm:$0xff]
        %v556 = vld [vmem:[%s3 + $0x60] sm:$0xff]
        %v557 = vld [vmem:[%s3 + $0x68] sm:$0xff]
        %v558 = vld [vmem:[%s3 + $0x70] sm:$0xff]
        %v559 = vld [vmem:[%s3 + $0x78] sm:$0xff]
        %v560 = vld [vmem:[%s3 + $0x80] sm:$0xff]
        %v561 = vld [vmem:[%s3 + $0x88] sm:$0xff]
        %v562 = vld [vmem:[%s3 + $0x90] sm:$0xff]
        %v563 = vld [vmem:[%s3 + $0x98] sm:$0xff]
        %v564 = vld [vmem:[%s3 + $0xa0] sm:$0xff]
        %v565 = vld [vmem:[%s3 + $0xa8] sm:$0xff]
        %v566 = vld [vmem:[%s3 + $0xb0] sm:$0xff]
        %v567 = vld [vmem:[%s3 + $0xb8] sm:$0xff]
        %v568 = vld [vmem:[%s3 + $0xc0] sm:$0xff]
        %v569 = vld [vmem:[%s3 + $0xc8] sm:$0xff]
        %v570 = vld [vmem:[%s3 + $0xd0] sm:$0xff]
        %v571 = vld [vmem:[%s3 + $0xd8] sm:$0xff]
        %v572 = vld [vmem:[%s3 + $0xe0] sm:$0xff]
        %v573 = vld [vmem:[%s3 + $0xe8] sm:$0xff]
        %v574 = vld [vmem:[%s3 + $0xf0] sm:$0xff]
        %v575 = vld [vmem:[%s3 + $0xf8] sm:$0xff]
        %v576 = vld [vmem:[%s4] sm:$0x3]
        %v578 = vlaneseq
        %v579 = vshrl.u32 %v578, 7
        %v580 = vsub.s32 0, %v579
        %v581 = vrot.slane %v576, %v580
        %v582 = vlaneseq
        %v583 = vshrl.u32 %v582, 7
        %v584 = vsub.s32 1, %v583
        %v585 = vrot.slane %v576, %v584
        %v620 = vunpack.c.l.b16 %v544
        %v621 = vunpack.c.h.b16 %v544
        %v622 = vunpack.c.l.b16 %v545
        %v623 = vunpack.c.h.b16 %v545
        %v624 = vunpack.c.l.b16 %v546
        %v625 = vunpack.c.h.b16 %v546
        %v626 = vunpack.c.l.b16 %v547
        %v627 = vunpack.c.h.b16 %v547
        %v628 = vunpack.c.l.b16 %v548
        %v629 = vunpack.c.h.b16 %v548
        %v630 = vunpack.c.l.b16 %v549
        %v631 = vunpack.c.h.b16 %v549
        %v632 = vunpack.c.l.b16 %v550
        %v633 = vunpack.c.h.b16 %v550
        %v634 = vunpack.c.l.b16 %v551
        %v635 = vunpack.c.h.b16 %v551
        %v636 = vunpack.c.l.b16 %v552
        %v637 = vunpack.c.h.b16 %v552
        %v638 = vunpack.c.l.b16 %v553
        %v639 = vunpack.c.h.b16 %v553
        %v640 = vunpack.c.l.b16 %v554
        %v641 = vunpack.c.h.b16 %v554
        %v642 = vunpack.c.l.b16 %v555
        %v643 = vunpack.c.h.b16 %v555
        %v644 = vunpack.c.l.b16 %v556
        %v645 = vunpack.c.h.b16 %v556
        %v646 = vunpack.c.l.b16 %v557
        %v647 = vunpack.c.h.b16 %v557
        %v648 = vunpack.c.l.b16 %v558
        %v649 = vunpack.c.h.b16 %v558
        %v650 = vunpack.c.l.b16 %v559
        %v651 = vunpack.c.h.b16 %v559
        %v652 = vunpack.c.l.b16 %v560
        %v653 = vunpack.c.h.b16 %v560
        %v654 = vunpack.c.l.b16 %v561
        %v655 = vunpack.c.h.b16 %v561
        %v656 = vunpack.c.l.b16 %v562
        %v657 = vunpack.c.h.b16 %v562
        %v658 = vunpack.c.l.b16 %v563
        %v659 = vunpack.c.h.b16 %v563
        %v660 = vunpack.c.l.b16 %v564
        %v661 = vunpack.c.h.b16 %v564
        %v662 = vunpack.c.l.b16 %v565
        %v663 = vunpack.c.h.b16 %v565
        %v664 = vunpack.c.l.b16 %v566
        %v665 = vunpack.c.h.b16 %v566
        %v666 = vunpack.c.l.b16 %v567
        %v667 = vunpack.c.h.b16 %v567
        %v668 = vunpack.c.l.b16 %v568
        %v669 = vunpack.c.h.b16 %v568
        %v670 = vunpack.c.l.b16 %v569
        %v671 = vunpack.c.h.b16 %v569
        %v672 = vunpack.c.l.b16 %v570
        %v673 = vunpack.c.h.b16 %v570
        %v674 = vunpack.c.l.b16 %v571
        %v675 = vunpack.c.h.b16 %v571
        %v676 = vunpack.c.l.b16 %v572
        %v677 = vunpack.c.h.b16 %v572
        %v678 = vunpack.c.l.b16 %v573
        %v679 = vunpack.c.h.b16 %v573
        %v680 = vunpack.c.l.b16 %v574
        %v681 = vunpack.c.h.b16 %v574
        %v682 = vunpack.c.l.b16 %v575
        %v683 = vunpack.c.h.b16 %v575
        %v684 = vpack.c.b16 %v622, %v620
        %v685 = vpack.c.b16 %v623, %v621
        %v686 = vpack.c.b16 %v626, %v624
        %v687 = vpack.c.b16 %v627, %v625
        %v688 = vpack.c.b16 %v630, %v628
        %v689 = vpack.c.b16 %v631, %v629
        %v690 = vpack.c.b16 %v634, %v632
        %v691 = vpack.c.b16 %v635, %v633
        %v692 = vpack.c.b16 %v638, %v636
        %v693 = vpack.c.b16 %v639, %v637
        %v694 = vpack.c.b16 %v642, %v640
        %v695 = vpack.c.b16 %v643, %v641
        %v696 = vpack.c.b16 %v646, %v644
        %v697 = vpack.c.b16 %v647, %v645
        %v698 = vpack.c.b16 %v650, %v648
        %v699 = vpack.c.b16 %v651, %v649
        %v700 = vpack.c.b16 %v654, %v652
        %v701 = vpack.c.b16 %v655, %v653
        %v702 = vpack.c.b16 %v658, %v656
        %v703 = vpack.c.b16 %v659, %v657
        %v704 = vpack.c.b16 %v662, %v660
        %v705 = vpack.c.b16 %v663, %v661
        %v706 = vpack.c.b16 %v666, %v664
        %v707 = vpack.c.b16 %v667, %v665
        %v708 = vpack.c.b16 %v670, %v668
        %v709 = vpack.c.b16 %v671, %v669
        %v710 = vpack.c.b16 %v674, %v672
        %v711 = vpack.c.b16 %v675, %v673
        %v712 = vpack.c.b16 %v678, %v676
        %v713 = vpack.c.b16 %v679, %v677
        %v714 = vpack.c.b16 %v682, %v680
        %v715 = vpack.c.b16 %v683, %v681
        %748 = vmatprep.subr.bf16.mxu0 %v699
        %749 = vmatpush1.bf16.msra.mxu0 %v698
        %750 = vmatprep.subr.bf16.mxu0 %v697
        %751 = vmatpush1.bf16.msra.mxu0 %v696
        %752 = vmatprep.subr.bf16.mxu0 %v695
        %753 = vmatpush1.bf16.msra.mxu0 %v694
        %754 = vmatprep.subr.bf16.mxu0 %v693
        %755 = vmatpush1.bf16.msra.mxu0 %v692
        %756 = vmatprep.subr.bf16.mxu0 %v691
        %757 = vmatpush1.bf16.msra.mxu0 %v690
        %758 = vmatprep.subr.bf16.mxu0 %v689
        %759 = vmatpush1.bf16.msra.mxu0 %v688
        %760 = vmatprep.subr.bf16.mxu0 %v687
        %761 = vmatpush1.bf16.msra.mxu0 %v686
        %762 = vmatprep.subr.bf16.mxu0 %v685
        %763 = vmatpush1.bf16.msra.mxu0 %v684
        %764 = vmatprep.subr.bf16.mxu0 %v715
        %765 = vmatpush2.bf16.msra.mxu0 %v714
        %766 = vmatprep.subr.bf16.mxu0 %v713
        %767 = vmatpush2.bf16.msra.mxu0 %v712
        %768 = vmatprep.subr.bf16.mxu0 %v711
        %769 = vmatpush2.bf16.msra.mxu0 %v710
        %770 = vmatprep.subr.bf16.mxu0 %v709
        %771 = vmatpush2.bf16.msra.mxu0 %v708
        %772 = vmatprep.subr.bf16.mxu0 %v707
        %773 = vmatpush2.bf16.msra.mxu0 %v706
        %774 = vmatprep.subr.bf16.mxu0 %v705
        %775 = vmatpush2.bf16.msra.mxu0 %v704
        %776 = vmatprep.subr.bf16.mxu0 %v703
        %777 = vmatpush2.bf16.msra.mxu0 %v702
        %778 = vmatprep.subr.bf16.mxu0 %v701
        %779 = vmatpush2.bf16.msra.mxu0 %v700
        %780 = vmatprep.mubr.bf16.mxu0 %v529
        %781 = vmatmul.mubr.bf16.gmra.mxu0 %v528
        %v782 = vpop.f32.mrf.mxu0
        %v783 = vadd.f32 %v581, %v782
        %v784 = vpop.f32.mrf.mxu0
        %v785 = vadd.f32 %v585, %v784
        %v786 = vpop.f32.mrf.mxu0
        %v787 = vadd.f32 %v581, %v786
        %v788 = vpop.f32.mrf.mxu0
        %v789 = vadd.f32 %v585, %v788
        %790 = vmatprep.mubr.bf16.mxu0 %v531
        %791 = vmatmul.mubr.bf16.gmra.mxu0 %v530
        %v792 = vpop.f32.mrf.mxu0
        %v793 = vadd.f32 %v581, %v792
        %v794 = vpop.f32.mrf.mxu0
        %v795 = vadd.f32 %v585, %v794
        %v796 = vpop.f32.mrf.mxu0
        %v797 = vadd.f32 %v581, %v796
        %v798 = vpop.f32.mrf.mxu0
        %v799 = vadd.f32 %v585, %v798
        %800 = vmatprep.mubr.bf16.mxu0 %v533
        %801 = vmatmul.mubr.bf16.gmra.mxu0 %v532
        %v802 = vpop.f32.mrf.mxu0
        %v803 = vadd.f32 %v581, %v802
        %v804 = vpop.f32.mrf.mxu0
        %v805 = vadd.f32 %v585, %v804
        %v806 = vpop.f32.mrf.mxu0
        %v807 = vadd.f32 %v581, %v806
        %v808 = vpop.f32.mrf.mxu0
        %v809 = vadd.f32 %v585, %v808
        %810 = vmatprep.mubr.bf16.mxu0 %v535
        %811 = vmatmul.mubr.bf16.gmra.mxu0 %v534
        %v812 = vpop.f32.mrf.mxu0
        %v813 = vadd.f32 %v581, %v812
        %v814 = vpop.f32.mrf.mxu0
        %v815 = vadd.f32 %v585, %v814
        %v816 = vpop.f32.mrf.mxu0
        %v817 = vadd.f32 %v581, %v816
        %v818 = vpop.f32.mrf.mxu0
        %v819 = vadd.f32 %v585, %v818
        %820 = vmatprep.mubr.bf16.mxu0 %v537
        %821 = vmatmul.mubr.bf16.gmra.mxu0 %v536
        %v822 = vpop.f32.mrf.mxu0
        %v823 = vadd.f32 %v581, %v822
        %v824 = vpop.f32.mrf.mxu0
        %v825 = vadd.f32 %v585, %v824
        %v826 = vpop.f32.mrf.mxu0
        %v827 = vadd.f32 %v581, %v826
        %v828 = vpop.f32.mrf.mxu0
        %v829 = vadd.f32 %v585, %v828
        %830 = vmatprep.mubr.bf16.mxu0 %v539
        %831 = vmatmul.mubr.bf16.gmra.mxu0 %v538
        %v832 = vpop.f32.mrf.mxu0
        %v833 = vadd.f32 %v581, %v832
        %v834 = vpop.f32.mrf.mxu0
        %v835 = vadd.f32 %v585, %v834
        %v836 = vpop.f32.mrf.mxu0
        %v837 = vadd.f32 %v581, %v836
        %v838 = vpop.f32.mrf.mxu0
        %v839 = vadd.f32 %v585, %v838
        %840 = vmatprep.mubr.bf16.mxu0 %v541
        %841 = vmatmul.mubr.bf16.gmra.mxu0 %v540
        %v842 = vpop.f32.mrf.mxu0
        %v843 = vadd.f32 %v581, %v842
        %v844 = vpop.f32.mrf.mxu0
        %v845 = vadd.f32 %v585, %v844
        %v846 = vpop.f32.mrf.mxu0
        %v847 = vadd.f32 %v581, %v846
        %v848 = vpop.f32.mrf.mxu0
        %v849 = vadd.f32 %v585, %v848
        %850 = vmatprep.mubr.bf16.mxu0 %v543
        %851 = vmatmul.mubr.bf16.gmra.mxu0 %v542
        %v852 = vpop.f32.mrf.mxu0
        %v853 = vadd.f32 %v581, %v852
        %v854 = vpop.f32.mrf.mxu0
        %v855 = vadd.f32 %v585, %v854
        %v856 = vpop.f32.mrf.mxu0
        %v857 = vadd.f32 %v581, %v856
        %v858 = vpop.f32.mrf.mxu0
        %v859 = vadd.f32 %v585, %v858
        %860 = vdwg.mxu0
        %v861 = vmax.f32 %v783, 0.0
        %v862 = vmax.f32 %v785, 0.0
        %v863 = vmax.f32 %v787, 0.0
        %v864 = vmax.f32 %v789, 0.0
        %v865 = vmax.f32 %v793, 0.0
        %v866 = vmax.f32 %v795, 0.0
        %v867 = vmax.f32 %v797, 0.0
        %v868 = vmax.f32 %v799, 0.0
        %v869 = vmax.f32 %v803, 0.0
        %v870 = vmax.f32 %v805, 0.0
        %v871 = vmax.f32 %v807, 0.0
        %v872 = vmax.f32 %v809, 0.0
        %v873 = vmax.f32 %v813, 0.0
        %v874 = vmax.f32 %v815, 0.0
        %v875 = vmax.f32 %v817, 0.0
        %v876 = vmax.f32 %v819, 0.0
        %v877 = vmax.f32 %v823, 0.0
        %v878 = vmax.f32 %v825, 0.0
        %v879 = vmax.f32 %v827, 0.0
        %v880 = vmax.f32 %v829, 0.0
        %v881 = vmax.f32 %v833, 0.0
        %v882 = vmax.f32 %v835, 0.0
        %v883 = vmax.f32 %v837, 0.0
        %v884 = vmax.f32 %v839, 0.0
        %v885 = vmax.f32 %v843, 0.0
        %v886 = vmax.f32 %v845, 0.0
        %v887 = vmax.f32 %v847, 0.0
        %v888 = vmax.f32 %v849, 0.0
        %v889 = vmax.f32 %v853, 0.0
        %v890 = vmax.f32 %v855, 0.0
        %v891 = vmax.f32 %v857, 0.0
        %v892 = vmax.f32 %v859, 0.0
        %v893 = vpack.c.bf16 %v863, %v861
        %v894 = vpack.c.bf16 %v864, %v862
        %v895 = vpack.c.bf16 %v867, %v865
        %v896 = vpack.c.bf16 %v868, %v866
        %v897 = vpack.c.bf16 %v871, %v869
        %v898 = vpack.c.bf16 %v872, %v870
        %v899 = vpack.c.bf16 %v875, %v873
        %v900 = vpack.c.bf16 %v876, %v874
        %v901 = vpack.c.bf16 %v879, %v877
        %v902 = vpack.c.bf16 %v880, %v878
        %v903 = vpack.c.bf16 %v883, %v881
        %v904 = vpack.c.bf16 %v884, %v882
        %v905 = vpack.c.bf16 %v887, %v885
        %v906 = vpack.c.bf16 %v888, %v886
        %v907 = vpack.c.bf16 %v891, %v889
        %v908 = vpack.c.bf16 %v892, %v890
        %v909 = vld [vmem:[#allocation2] sm:$0xf]
        %v910 = vld [vmem:[#allocation2 + $0x4] sm:$0xf]
        %v911 = vld [vmem:[#allocation2 + $0x8] sm:$0xf]
        %v912 = vld [vmem:[#allocation2 + $0xc] sm:$0xf]
        %v913 = vld [vmem:[#allocation2 + $0x10] sm:$0xf]
        %v914 = vld [vmem:[#allocation2 + $0x14] sm:$0xf]
        %v915 = vld [vmem:[#allocation2 + $0x18] sm:$0xf]
        %v916 = vld [vmem:[#allocation2 + $0x1c] sm:$0xf]
        %v917 = vld [vmem:[#allocation2 + $0x20] sm:$0xf]
        %v918 = vld [vmem:[#allocation2 + $0x24] sm:$0xf]
        %v919 = vld [vmem:[#allocation2 + $0x28] sm:$0xf]
        %v920 = vld [vmem:[#allocation2 + $0x2c] sm:$0xf]
        %v921 = vld [vmem:[#allocation2 + $0x30] sm:$0xf]
        %v922 = vld [vmem:[#allocation2 + $0x34] sm:$0xf]
        %v923 = vld [vmem:[#allocation2 + $0x38] sm:$0xf]
        %v924 = vld [vmem:[#allocation2 + $0x3c] sm:$0xf]
        %v925 = vld [vmem:[#allocation2 + $0x40] sm:$0xf]
        %v926 = vld [vmem:[#allocation2 + $0x44] sm:$0xf]
        %v927 = vld [vmem:[#allocation2 + $0x48] sm:$0xf]
        %v928 = vld [vmem:[#allocation2 + $0x4c] sm:$0xf]
        %v929 = vld [vmem:[#allocation2 + $0x50] sm:$0xf]
        %v930 = vld [vmem:[#allocation2 + $0x54] sm:$0xf]
        %v931 = vld [vmem:[#allocation2 + $0x58] sm:$0xf]
        %v932 = vld [vmem:[#allocation2 + $0x5c] sm:$0xf]
        %v933 = vld [vmem:[#allocation2 + $0x60] sm:$0xf]
        %v934 = vld [vmem:[#allocation2 + $0x64] sm:$0xf]
        %v935 = vld [vmem:[#allocation2 + $0x68] sm:$0xf]
        %v936 = vld [vmem:[#allocation2 + $0x6c] sm:$0xf]
        %v937 = vld [vmem:[#allocation2 + $0x70] sm:$0xf]
        %v938 = vld [vmem:[#allocation2 + $0x74] sm:$0xf]
        %v939 = vld [vmem:[#allocation2 + $0x78] sm:$0xf]
        %v940 = vld [vmem:[#allocation2 + $0x7c] sm:$0xf]
        %v941 = vld [vmem:[%s6] sm:$0x1]
        %v943 = vlaneseq
        %v944 = vshrl.u32 %v943, 7
        %v945 = vsub.s32 0, %v944
        %v946 = vrot.slane %v941, %v945
        %v980 = vunpack.c.l.b16 %v909
        %v981 = vunpack.c.l.b16 %v910
        %v982 = vunpack.c.l.b16 %v911
        %v983 = vunpack.c.l.b16 %v912
        %v984 = vunpack.c.l.b16 %v913
        %v985 = vunpack.c.l.b16 %v914
        %v986 = vunpack.c.l.b16 %v915
        %v987 = vunpack.c.l.b16 %v916
        %v988 = vunpack.c.l.b16 %v917
        %v989 = vunpack.c.l.b16 %v918
        %v990 = vunpack.c.l.b16 %v919
        %v991 = vunpack.c.l.b16 %v920
        %v992 = vunpack.c.l.b16 %v921
        %v993 = vunpack.c.l.b16 %v922
        %v994 = vunpack.c.l.b16 %v923
        %v995 = vunpack.c.l.b16 %v924
        %v996 = vunpack.c.l.b16 %v925
        %v997 = vunpack.c.l.b16 %v926
        %v998 = vunpack.c.l.b16 %v927
        %v999 = vunpack.c.l.b16 %v928
        %v1000 = vunpack.c.l.b16 %v929
        %v1001 = vunpack.c.l.b16 %v930
        %v1002 = vunpack.c.l.b16 %v931
        %v1003 = vunpack.c.l.b16 %v932
        %v1004 = vunpack.c.l.b16 %v933
        %v1005 = vunpack.c.l.b16 %v934
        %v1006 = vunpack.c.l.b16 %v935
        %v1007 = vunpack.c.l.b16 %v936
        %v1008 = vunpack.c.l.b16 %v937
        %v1009 = vunpack.c.l.b16 %v938
        %v1010 = vunpack.c.l.b16 %v939
        %v1011 = vunpack.c.l.b16 %v940
        %v1012 = vpack.c.b16 %v981, %v980
        %v1013 = vpack.c.b16 %v983, %v982
        %v1014 = vpack.c.b16 %v985, %v984
        %v1015 = vpack.c.b16 %v987, %v986
        %v1016 = vpack.c.b16 %v989, %v988
        %v1017 = vpack.c.b16 %v991, %v990
        %v1018 = vpack.c.b16 %v993, %v992
        %v1019 = vpack.c.b16 %v995, %v994
        %v1020 = vpack.c.b16 %v997, %v996
        %v1021 = vpack.c.b16 %v999, %v998
        %v1022 = vpack.c.b16 %v1001, %v1000
        %v1023 = vpack.c.b16 %v1003, %v1002
        %v1024 = vpack.c.b16 %v1005, %v1004
        %v1025 = vpack.c.b16 %v1007, %v1006
        %v1026 = vpack.c.b16 %v1009, %v1008
        %v1027 = vpack.c.b16 %v1011, %v1010
        %1044 = vmatprep.subr.bf16.mxu0 0
        %1045 = vmatpush1.bf16.msra.mxu0 %v1019
        %1046 = vmatprep.subr.bf16.mxu0 0
        %1047 = vmatpush1.bf16.msra.mxu0 %v1018
        %1048 = vmatprep.subr.bf16.mxu0 0
        %1049 = vmatpush1.bf16.msra.mxu0 %v1017
        %1050 = vmatprep.subr.bf16.mxu0 0
        %1051 = vmatpush1.bf16.msra.mxu0 %v1016
        %1052 = vmatprep.subr.bf16.mxu0 0
        %1053 = vmatpush1.bf16.msra.mxu0 %v1015
        %1054 = vmatprep.subr.bf16.mxu0 0
        %1055 = vmatpush1.bf16.msra.mxu0 %v1014
        %1056 = vmatprep.subr.bf16.mxu0 0
        %1057 = vmatpush1.bf16.msra.mxu0 %v1013
        %1058 = vmatprep.subr.bf16.mxu0 0
        %1059 = vmatpush1.bf16.msra.mxu0 %v1012
        %1060 = vmatprep.subr.bf16.mxu0 0
        %1061 = vmatpush2.bf16.msra.mxu0 %v1027
        %1062 = vmatprep.subr.bf16.mxu0 0
        %1063 = vmatpush2.bf16.msra.mxu0 %v1026
        %1064 = vmatprep.subr.bf16.mxu0 0
        %1065 = vmatpush2.bf16.msra.mxu0 %v1025
        %1066 = vmatprep.subr.bf16.mxu0 0
        %1067 = vmatpush2.bf16.msra.mxu0 %v1024
        %1068 = vmatprep.subr.bf16.mxu0 0
        %1069 = vmatpush2.bf16.msra.mxu0 %v1023
        %1070 = vmatprep.subr.bf16.mxu0 0
        %1071 = vmatpush2.bf16.msra.mxu0 %v1022
        %1072 = vmatprep.subr.bf16.mxu0 0
        %1073 = vmatpush2.bf16.msra.mxu0 %v1021
        %1074 = vmatprep.subr.bf16.mxu0 0
        %1075 = vmatpush2.bf16.msra.mxu0 %v1020
        %1076 = vmatprep.mubr.bf16.mxu0 %v894
        %1077 = vmatmul.mubr.bf16.gmra.mxu0 %v893
        %v1078 = vpop.f32.mrf.mxu0
        %v1079 = vadd.f32 %v946, %v1078
        %v1080 = vpop.f32.mrf.mxu0
        %v1081 = vpop.f32.mrf.mxu0
        %v1082 = vadd.f32 %v946, %v1081
        %v1083 = vpop.f32.mrf.mxu0
        %1084 = vmatprep.mubr.bf16.mxu0 %v896
        %1085 = vmatmul.mubr.bf16.gmra.mxu0 %v895
        %v1086 = vpop.f32.mrf.mxu0
        %v1087 = vadd.f32 %v946, %v1086
        %v1088 = vpop.f32.mrf.mxu0
        %v1089 = vpop.f32.mrf.mxu0
        %v1090 = vadd.f32 %v946, %v1089
        %v1091 = vpop.f32.mrf.mxu0
        %1092 = vmatprep.mubr.bf16.mxu0 %v898
        %1093 = vmatmul.mubr.bf16.gmra.mxu0 %v897
        %v1094 = vpop.f32.mrf.mxu0
        %v1095 = vadd.f32 %v946, %v1094
        %v1096 = vpop.f32.mrf.mxu0
        %v1097 = vpop.f32.mrf.mxu0
        %v1098 = vadd.f32 %v946, %v1097
        %v1099 = vpop.f32.mrf.mxu0
        %1100 = vmatprep.mubr.bf16.mxu0 %v900
        %1101 = vmatmul.mubr.bf16.gmra.mxu0 %v899
        %v1102 = vpop.f32.mrf.mxu0
        %v1103 = vadd.f32 %v946, %v1102
        %v1104 = vpop.f32.mrf.mxu0
        %v1105 = vpop.f32.mrf.mxu0
        %v1106 = vadd.f32 %v946, %v1105
        %v1107 = vpop.f32.mrf.mxu0
        %1108 = vmatprep.mubr.bf16.mxu0 %v902
        %1109 = vmatmul.mubr.bf16.gmra.mxu0 %v901
        %v1110 = vpop.f32.mrf.mxu0
        %v1111 = vadd.f32 %v946, %v1110
        %v1112 = vpop.f32.mrf.mxu0
        %v1113 = vpop.f32.mrf.mxu0
        %v1114 = vadd.f32 %v946, %v1113
        %v1115 = vpop.f32.mrf.mxu0
        %1116 = vmatprep.mubr.bf16.mxu0 %v904
        %1117 = vmatmul.mubr.bf16.gmra.mxu0 %v903
        %v1118 = vpop.f32.mrf.mxu0
        %v1119 = vadd.f32 %v946, %v1118
        %v1120 = vpop.f32.mrf.mxu0
        %v1121 = vpop.f32.mrf.mxu0
        %v1122 = vadd.f32 %v946, %v1121
        %v1123 = vpop.f32.mrf.mxu0
        %1124 = vmatprep.mubr.bf16.mxu0 %v906
        %1125 = vmatmul.mubr.bf16.gmra.mxu0 %v905
        %v1126 = vpop.f32.mrf.mxu0
        %v1127 = vadd.f32 %v946, %v1126
        %v1128 = vpop.f32.mrf.mxu0
        %v1129 = vpop.f32.mrf.mxu0
        %v1130 = vadd.f32 %v946, %v1129
        %v1131 = vpop.f32.mrf.mxu0
        %1132 = vmatprep.mubr.bf16.mxu0 %v908
        %1133 = vmatmul.mubr.bf16.gmra.mxu0 %v907
        %v1134 = vpop.f32.mrf.mxu0
        %v1135 = vadd.f32 %v946, %v1134
        %v1136 = vpop.f32.mrf.mxu0
        %v1137 = vpop.f32.mrf.mxu0
        %v1138 = vadd.f32 %v946, %v1137
        %v1139 = vpop.f32.mrf.mxu0
        %1140 = vdwg.mxu0
        %v1141 = vtanh.pop %v1079
        %v1142 = vtanh.pop %v1082
        %v1143 = vtanh.pop %v1087
        %v1144 = vtanh.pop %v1090
        %v1145 = vtanh.pop %v1095
        %v1146 = vtanh.pop %v1098
        %v1147 = vtanh.pop %v1103
        %v1148 = vtanh.pop %v1106
        %v1149 = vtanh.pop %v1111
        %v1150 = vtanh.pop %v1114
        %v1151 = vtanh.pop %v1119
        %v1152 = vtanh.pop %v1122
        %v1153 = vtanh.pop %v1127
        %v1154 = vtanh.pop %v1130
        %v1155 = vtanh.pop %v1135
        %v1156 = vtanh.pop %v1138
        %vm1157 = vcmask 31744
        %1158 = vst.msk [vmem:[%s295] sm:$0xff] %vm1157, %v1141
        %1159 = vst.msk [vmem:[%s295 + $0x8] sm:$0xff] %vm1157, %v1142
        %1160 = vst.msk [vmem:[%s295 + $0x10] sm:$0xff] %vm1157, %v1143
        %1161 = vst.msk [vmem:[%s295 + $0x18] sm:$0xff] %vm1157, %v1144
        %1162 = vst.msk [vmem:[%s295 + $0x20] sm:$0xff] %vm1157, %v1145
        %1163 = vst.msk [vmem:[%s295 + $0x28] sm:$0xff] %vm1157, %v1146
        %1164 = vst.msk [vmem:[%s295 + $0x30] sm:$0xff] %vm1157, %v1147
        %1165 = vst.msk [vmem:[%s295 + $0x38] sm:$0xff] %vm1157, %v1148
        %1166 = vst.msk [vmem:[%s295 + $0x40] sm:$0xff] %vm1157, %v1149
        %1167 = vst.msk [vmem:[%s295 + $0x48] sm:$0xff] %vm1157, %v1150
        %1168 = vst.msk [vmem:[%s295 + $0x50] sm:$0xff] %vm1157, %v1151
        %1169 = vst.msk [vmem:[%s295 + $0x58] sm:$0xff] %vm1157, %v1152
        %1170 = vst.msk [vmem:[%s295 + $0x60] sm:$0xff] %vm1157, %v1153
        %1171 = vst.msk [vmem:[%s295 + $0x68] sm:$0xff] %vm1157, %v1154
        %1172 = vst.msk [vmem:[%s295 + $0x70] sm:$0xff] %vm1157, %v1155
        %1173 = vst.msk [vmem:[%s295 + $0x78] sm:$0xff] %vm1157, %v1156
        %s1174 = smul.u32 16, %s19
        %p1175 = scmp.lt.s32.totalorder %s1174, 31
        %s1176 = scalar_select %p1175, %s1174, 31
        %s1177 = smul.addr %s1176, 8
        %s1178 = scalar_lea.vmem %s7, %s1177
        // Predicated region
        $region53: #{actor_forward.1} parent=47 // pred_check
          %p1179 = pneg %p189
        $region54: #{actor_forward.1} parent=47 // pred_check_branch
          %1181 = sbr.rel (%p1179) target = $region56
        $region55: #{actor_forward.1} parent=47 // pred_region
          %s1182 = smul.u32 16, %s19
        $region56: #{actor_forward.1} parent=47 // pred_fallthru
          _
      $region48: #{actor_forward.1} parent=5 // pred_fallthru
        _
      %p1183 = scmp.le.s32.totalorder 2, %s14
      // Predicated region
      $region57: #{actor_forward.1} parent=5 // pred_check
        %p1184 = pneg %p1183
      $region58: #{actor_forward.1} parent=5 // pred_check_branch
        %1186 = sbr.rel (%p1184) target = $region60
      $region59: #{actor_forward.1} parent=5 // pred_region
        %s1187 = ssub.s32 %s14, 2
        // Predicated region
        $region61: #{actor_forward.1} parent=59 // pred_check
          %p1188 = pneg %p195
        $region62: #{actor_forward.1} parent=59 // pred_check_branch
          %1190 = sbr.rel (%p1188) target = $region64
        $region63: #{actor_forward.1} parent=59 // pred_region
          %s1191 = smul.u32 16, %s20
          %p1192 = scmp.lt.s32.totalorder %s1191, 31
          %s1193 = scalar_select %p1192, %s1191, 31
          %s1194 = smul.addr %s1193, 8
          %s1195 = scalar_lea.vmem %s7, %s1194
        $region64: #{actor_forward.1} parent=59 // pred_fallthru
          _
      $region60: #{actor_forward.1} parent=5 // pred_fallthru
        _
    $region6: #{actor_forward.1} parent=1 // loop_footer
      %s18 = sadd.s32 1, %s14
    $region7: #{actor_forward.1} parent=1 // loop_footer_branch
      %13 = sbr.rel target = $region3
    $region8: #{actor_forward.1} parent=1 // loop_exit
      _
    %1196 = vsyncpa [#allocation3], 1
    %s1197 = scalar_lea.sflag [#allocation3], 1
    %1198 = vsyncpa %s1197, 1

</llo_original>
